<compile_context>
chip_gen: v5e
topology: v5e:2x2
jax: 0.10.0
libtpu: 0.0.40
codegen_flags: <defaults>
</compile_context>

<pallas_src>
import jax
import jax.numpy as jnp
from jax import lax
from jax.experimental import pallas as pl
from jax.experimental.pallas import tpu as pltpu


def _round_up(x, m):
    return ((x + m - 1) // m) * m


def _einsum_bhid_bhjd_kernel(a_ref, b_ref, o_ref):
    # a_ref: (TM, D), b_ref: (TN, D), o_ref: (TM, TN) for the current grid step.
    # Contract the shared last (D) axes directly on the MXU (transposed-RHS
    # matmul form), so no XLU transpose / VMEM re-layout of the (TN, D) tile.
    s = lax.dot_general(
        a_ref[...],
        b_ref[...],
        dimension_numbers=(((1,), (1,)), ((), ())),
        preferred_element_type=jnp.float32,
    )
    o_ref[...] = s.astype(o_ref.dtype)


_VMEM_BUDGET = 24 * 1024 * 1024  # headroom under the 32 MiB scoped default (v7x-safe)


def pallas_einsum(equation, a, b, *, tile_m=1024, tile_n=1024):
    """Pallas-backed einsum for the 'bhid,bhjd->bhij' contraction."""
    if equation != "bhid,bhjd->bhij":
        # TODO(synk): general einsum equations are not kernelized here.
        raise NotImplementedError(f"unsupported equation: {equation}")

    B, H, I, D = a.shape
    Bb, Hb, J, Db = b.shape
    assert (B, H, D) == (Bb, Hb, Db), "operand shape mismatch"

    out_dtype = jnp.result_type(a.dtype, b.dtype)
    if a.dtype != b.dtype:
        # Keep the MXU on the fast (narrow) path: never promote a bf16 operand
        # to f32 just to match dtypes.  Accumulation is f32 regardless via
        # preferred_element_type; the output keeps the promoted result dtype.
        # (Semantics-dependent vs. torch.einsum, which promotes both inputs.)
        compute_dtype = min((a.dtype, b.dtype), key=lambda d: jnp.dtype(d).itemsize)
        a = a.astype(compute_dtype)
        b = b.astype(compute_dtype)

    in_item = jnp.dtype(a.dtype).itemsize
    out_item = jnp.dtype(out_dtype).itemsize

    # Collapse batch and head into one fat leading grid axis (free reshape).
    BH = B * H
    a_f = a.reshape(BH, I, D)
    b_f = b.reshape(BH, J, D)

    # 128-aligned tiles (lane-dense output stores, MXU-native), capped at 1024.
    tm = min(tile_m, _round_up(I, 128))
    tn = min(tile_n, _round_up(J, 128))

    # Keep the double-buffered per-step footprint within the scoped-VMEM
    # default on every generation (v7x has only 64 MiB physical VMEM).
    def _footprint(tm_, tn_):
        return 2 * ((tm_ * D + tn_ * D) * in_item + tm_ * tn_ * out_item)

    while _footprint(tm, tn) > _VMEM_BUDGET and max(tm, tn) > 128:
        if tm >= tn:
            tm = max(128, tm // 2)
        else:
            tn = max(128, tn // 2)
    vmem_limit = None
    if _footprint(tm, tn) > _VMEM_BUDGET:
        # Very large head dim: D is kept fully resident per step.
        # TODO(synk): tile D with an f32 accumulator scratch + pl.when
        # init/finalize (axis marked 'arbitrary') instead of raising the limit.
        vmem_limit = min(int(_footprint(tm, tn) * 1.5), 100 * 1024 * 1024)

    n_i = pl.cdiv(I, tm)
    n_j = pl.cdiv(J, tn)

    # Grid ordering: the operand indexed by the *outer* (non-BH) axis stays
    # resident in VMEM across the innermost axis; the other operand is
    # re-fetched once per outer tile.  Total input read traffic is
    #   size(resident) + size(refetched) * n_tiles(resident axis),
    # which is minimized by keeping the *smaller* operand resident (the larger
    # operand is then re-read only ceil(smaller_axis / tile) times).  Small
    # effect for attention-sized D (output bytes dominate), but free to pick.
    a_resident = I <= J
    if a_resident:
        grid = (BH, n_i, n_j)
        a_spec = pl.BlockSpec((pl.Squeezed(), tm, D), lambda g, i, j: (g, i, 0))
        b_spec = pl.BlockSpec((pl.Squeezed(), tn, D), lambda g, i, j: (g, j, 0))
        o_spec = pl.BlockSpec((pl.Squeezed(), tm, tn), lambda g, i, j: (g, i, j))
        refetch_a, refetch_b = 1, n_i
    else:
        grid = (BH, n_j, n_i)
        a_spec = pl.BlockSpec((pl.Squeezed(), tm, D), lambda g, j, i: (g, i, 0))
        b_spec = pl.BlockSpec((pl.Squeezed(), tn, D), lambda g, j, i: (g, j, 0))
        o_spec = pl.BlockSpec((pl.Squeezed(), tm, tn), lambda g, j, i: (g, i, j))
        refetch_a, refetch_b = n_j, 1

    cost = pl.CostEstimate(
        flops=2 * BH * I * J * D,
        transcendentals=0,
        bytes_accessed=(
            BH * I * D * in_item * refetch_a
            + BH * J * D * in_item * refetch_b
            + BH * I * J * out_item
        ),
    )

    out = pl.pallas_call(
        _einsum_bhid_bhjd_kernel,
        out_shape=jax.ShapeDtypeStruct((BH, I, J), out_dtype),
        grid_spec=pltpu.PrefetchScalarGridSpec(
            num_scalar_prefetch=0,
            grid=grid,
            in_specs=[a_spec, b_spec],
            out_specs=o_spec,
        ),
        compiler_params=pltpu.CompilerParams(
            # All axes independent: lets v7x shard the grid across both
            # TensorCores; a no-op on single-TC v5e/v6e.
            dimension_semantics=("parallel", "parallel", "parallel"),
            vmem_limit_bytes=vmem_limit,
        ),
        cost_estimate=cost,
    )(a_f, b_f)

    # Restore the (B, H, I, J) layout (free reshape; no padded slice needed).
    return out.reshape(B, H, I, J)


class EinsumModule:
    """JAX/Pallas analogue of the PyTorch `einsum(RelPropSimple)` module.

    The module has no learnable parameters; forward = einsum(equation, *ops).
    The relprop/forward-hook machinery (autograd-based attribution) has no
    Pallas forward-pass equivalent and is intentionally not modeled here.
    """

    def __init__(self, equation):
        self.equation = equation

    def __call__(self, *operands):
        return pallas_einsum(self.equation, *operands)


if __name__ == "__main__":
    key = jax.random.PRNGKey(0)
    ka, kb, kc, kd = jax.random.split(key, 4)

    mod = EinsumModule("bhid,bhjd->bhij")

    # Case 1: small attention-like shapes (batch=2, heads=4, seq=8, dim=32), f32.
    B, H, I, J, D = 2, 4, 8, 8, 32
    a = jax.random.normal(ka, (B, H, I, D), dtype=jnp.float32)
    b = jax.random.normal(kb, (B, H, J, D), dtype=jnp.float32)
    out = jax.block_until_ready(mod(a, b))
    ref = jnp.einsum("bhid,bhjd->bhij", a, b)
    assert out.shape == (B, H, I, J)
    assert jnp.allclose(out, ref, atol=1e-5, rtol=1e-5)

    # Case 2: ragged (non-128-multiple) seqlens with I > J, bf16 in / bf16 out
    # with f32 accumulation.  Exercises the masked edge-block path (no wrapper
    # pad/slice) and the swapped grid ordering (B operand resident).
    B2, H2, I2, J2, D2 = 2, 2, 12, 10, 16
    aq = jax.random.normal(kc, (B2, H2, I2, D2), dtype=jnp.bfloat16)
    bq = jax.random.normal(kd, (B2, H2, J2, D2), dtype=jnp.bfloat16)
    out2 = jax.block_until_ready(mod(aq, bq))
    ref2 = jnp.einsum(
        "bhid,bhjd->bhij", aq.astype(jnp.float32), bq.astype(jnp.float32)
    )
    assert out2.shape == (B2, H2, I2, J2)
    assert jnp.allclose(out2.astype(jnp.float32), ref2, atol=2e-2, rtol=2e-2)

    print("KERNEL_OK")
</pallas_src>

<mosaic_0001>
module attributes {stable_mosaic.version = 11 : i64} {
  func.func @_einsum_bhid_bhjd_kernel(%arg0: i32, %arg1: i32, %arg2: i32, %arg3: memref<1x128x32xf32, #tpu.memory_space<vmem>>, %arg4: memref<1x128x32xf32, #tpu.memory_space<vmem>>, %arg5: memref<1x128x128xf32, #tpu.memory_space<vmem>>) attributes {dimension_semantics = [#tpu.dimension_semantics<parallel>, #tpu.dimension_semantics<parallel>, #tpu.dimension_semantics<parallel>], iteration_bounds = array<i64: 8, 1, 1>, scalar_prefetch = 0 : i64, scratch_operands = 0 : i64, tpu.core_type = #tpu.core_type<tc>, window_params = [{transform_indices = @transform_0, window_bounds = array<i64: 1, 128, 32>}, {transform_indices = @transform_1, window_bounds = array<i64: 1, 128, 32>}, {transform_indices = @transform_2, window_bounds = array<i64: 1, 128, 128>}]} {
    %c0 = arith.constant 0 : index
    %c0_0 = arith.constant 0 : index
    %c0_1 = arith.constant 0 : index
    %0 = vector.load %arg3[%c0, %c0_0, %c0_1] : memref<1x128x32xf32, #tpu.memory_space<vmem>>, vector<1x128x32xf32>
    %1 = vector.shape_cast %0 : vector<1x128x32xf32> to vector<128x32xf32>
    %c0_2 = arith.constant 0 : index
    %c0_3 = arith.constant 0 : index
    %c0_4 = arith.constant 0 : index
    %2 = vector.load %arg4[%c0_2, %c0_3, %c0_4] : memref<1x128x32xf32, #tpu.memory_space<vmem>>, vector<1x128x32xf32>
    %3 = vector.shape_cast %2 : vector<1x128x32xf32> to vector<128x32xf32>
    %cst = arith.constant dense<0.000000e+00> : vector<128x128xf32>
    %4 = tpu.matmul %1, %3, %cst {dimension_numbers = #tpu.dot_dimension_numbers<[1], [1], [0], [0], [0, 0, 1, 0], [], []>} : vector<128x32xf32>, vector<128x32xf32>, vector<128x128xf32> -> vector<128x128xf32>
    %c0_5 = arith.constant 0 : index
    %c0_6 = arith.constant 0 : index
    %c0_7 = arith.constant 0 : index
    %5 = vector.load %arg5[%c0_5, %c0_6, %c0_7] : memref<1x128x128xf32, #tpu.memory_space<vmem>>, vector<1x128x128xf32>
    %6 = vector.shape_cast %5 : vector<1x128x128xf32> to vector<128x128xf32>
    %7 = vector.shape_cast %4 : vector<128x128xf32> to vector<1x128x128xf32>
    tpu.vector_store %arg5[%c0_5, %c0_6, %c0_7], %7 {strides = array<i32>} : memref<1x128x128xf32, #tpu.memory_space<vmem>>, vector<1x128x128xf32>,
    return
  }
  func.func @transform_0(%arg0: i32, %arg1: i32, %arg2: i32) -> (i32, i32, i32) {
    %c0_i32 = arith.constant 0 : i32
    %c0_i32_0 = arith.constant 0 : i32
    return %arg0, %arg1, %c0_i32 : i32, i32, i32
  }
  func.func @transform_1(%arg0: i32, %arg1: i32, %arg2: i32) -> (i32, i32, i32) {
    %c0_i32 = arith.constant 0 : i32
    %c0_i32_0 = arith.constant 0 : i32
    return %arg0, %arg2, %c0_i32 : i32, i32, i32
  }
  func.func @transform_2(%arg0: i32, %arg1: i32, %arg2: i32) -> (i32, i32, i32) {
    %c0_i32 = arith.constant 0 : i32
    return %arg0, %arg1, %arg2 : i32, i32, i32
  }
}

</mosaic_0001>

<llo_original>
// kernel: tpu_custom_call.1
$region0: #{tpu_custom_call.1}
  #allocation0 [shape = 'u32[]', space=smem, size = 0x4, offset = 0x4, fixed_abs, tag = 'smem constant byte address 0x4 - core index']
  #allocation1 [shape = 'u32[72,128]{1,0:T(1,128)}', space=vmem, size = 0x9000, scoped, tag = 'internal scratch']
  %s0 = inlined_call_operand.hbm [shape: f32[8,8,32], index: 0, kind: input, shape index: {}]
  %s1 = inlined_call_operand.hbm [shape: f32[8,8,32], index: 1, kind: input, shape index: {}]
  %s2 = inlined_call_operand.hbm [shape: f32[8,8,8], index: 2, kind: output, shape index: {}]
  %s3 = sld [smem:[#allocation0]]
  $region49: #{tpu_custom_call.1} parent=0
    _
  %s5 = ssub.s32 1, %s3
  %s6 = scalar_select 0, %s5, %s3
  $region1: #{tpu_custom_call.1} parent=0
    #allocation2 [shape = 'u8[131072]{0}', space=vmem, size = 0x20000, scoped, tag = 'input window, operand 0']
    #allocation3 [shape = 's32[2]{0}', space=sflag, size = 0x8, scoped, tag = 'scoped memory for tpu_custom_call.1']
    #allocation4 [shape = 's32[2]{0}', space=sflag, size = 0x8, scoped, tag = 'scoped memory for tpu_custom_call.1']
    #allocation5 [shape = 'u8[131072]{0}', space=vmem, size = 0x20000, scoped, tag = 'input window, operand 1']
    #allocation6 [shape = 's32[2]{0}', space=sflag, size = 0x8, scoped, tag = 'scoped memory for tpu_custom_call.1']
    #allocation7 [shape = 'u8[131072]{0}', space=vmem, size = 0x20000, scoped, tag = 'output window, operand 0']
    %7 = vsyncpa [#allocation3], 0
    %s8 = scalar_lea.sflag [#allocation3], 1
    %9 = vsyncpa %s8, 0
    %10 = vsyncpa [#allocation6], 0
    %s11 = scalar_lea.sflag [#allocation6], 1
    %12 = vsyncpa %s11, 0
    %13 = vsyncpa [#allocation4], 0
    %s14 = scalar_lea.sflag [#allocation4], 1
    %15 = vsyncpa %s14, 0
    loop: start=0, step=1, limit=10
    $region2: #{tpu_custom_call.1} parent=1 // loop_pre_header
      _
    $region3: #{tpu_custom_call.1} parent=1 // loop_header
      %s17 = sphi 0, %s21
      %p18 = scmp.ge.s32.totalorder %s17, 10
      %s24 = sphi 0, %s43
      %s25 = sphi 0, %s39
      %s26 = sphi 0, %s35
      %s27 = sphi 0, %s24
      %s28 = sphi 0, %s25
      %s29 = sphi 0, %s26
      %s30 = sphi 0, %s27
      %s31 = sphi 0, %s28
      %s32 = sphi 0, %s29
      %s48 = sphi 0, %s50
      %s51 = sphi 0, %s48
      %s52 = sphi 0, %s51
      %s68 = sphi 0, %s52
      %s76 = sphi 0, %s78
      %s79 = sphi 0, %s76
      %s80 = sphi 0, %s79
      %s96 = sphi 0, %s80
      %s106 = sphi 0, %s108
      %s109 = sphi 0, %s106
      %s110 = sphi 0, %s109
      %s126 = sphi 0, %s110
    $region4: #{tpu_custom_call.1} parent=1 // loop_header_branch
      %20 = sbr.rel (%p18) target = $region8
    $region5: #{tpu_custom_call.1} parent=1 // loop_body
      %s22 = ssub.s32 %s17, 1
      %s23 = ssub.s32 %s17, 2
      %s33 = sadd.s32 1, %s26
      %p34 = scmp.ge.s32.totalorder %s33, 1
      %s35 = scalar_select %p34, 0, %s33
      %s36 = sadd.s32 1, %s25
      %s37 = scalar_select %p34, %s36, %s25
      %p38 = scmp.ge.s32.totalorder %s37, 1
      %s39 = scalar_select %p38, 0, %s37
      %s40 = sadd.s32 1, %s24
      %s41 = scalar_select %p38, %s40, %s24
      %p42 = scmp.ge.s32.totalorder %s41, 8
      %s43 = scalar_select %p42, 0, %s41
      %s44 = ssub.s32 %s24, %s43
      %s45 = ssub.s32 %s25, %s39
      %s46 = sor.u32 %s44, %s45
      %p47 = scmp.eq.s32.totalorder %s46, 0
      %s49 = sadd.s32 %s48, 1
      %s50 = scalar_select %p47, %s48, %s49
      %p53 = pneg %p47
      %p54 = scmp.eq.s32.totalorder %s17, 7
      %p55 = por %p53, %p54
      %p56 = scmp.ne.s32.totalorder %s48, %s51
      %p57 = scmp.eq.s32.totalorder %s17, 0
      %p58 = por %p56, %p57
      %p59 = scmp.ne.s32.totalorder %s48, %s51
      %p60 = scmp.eq.s32.totalorder %s22, 7
      %p61 = por %p59, %p60
      %p62 = scmp.ne.s32.totalorder %s51, %s52
      %p63 = scmp.eq.s32.totalorder %s22, 0
      %p64 = por %p62, %p63
      %p65 = scmp.ne.s32.totalorder %s51, %s52
      %p66 = scmp.eq.s32.totalorder %s23, 7
      %p67 = por %p65, %p66
      %p69 = scmp.ne.s32.totalorder %s52, %s68
      %p70 = scmp.eq.s32.totalorder %s23, 0
      %p71 = por %p69, %p70
      %s72 = ssub.s32 %s24, %s43
      %s73 = ssub.s32 %s26, %s35
      %s74 = sor.u32 %s72, %s73
      %p75 = scmp.eq.s32.totalorder %s74, 0
      %s77 = sadd.s32 %s76, 1
      %s78 = scalar_select %p75, %s76, %s77
      %p81 = pneg %p75
      %p82 = scmp.eq.s32.totalorder %s17, 7
      %p83 = por %p81, %p82
      %p84 = scmp.ne.s32.totalorder %s76, %s79
      %p85 = scmp.eq.s32.totalorder %s17, 0
      %p86 = por %p84, %p85
      %p87 = scmp.ne.s32.totalorder %s76, %s79
      %p88 = scmp.eq.s32.totalorder %s22, 7
      %p89 = por %p87, %p88
      %p90 = scmp.ne.s32.totalorder %s79, %s80
      %p91 = scmp.eq.s32.totalorder %s22, 0
      %p92 = por %p90, %p91
      %p93 = scmp.ne.s32.totalorder %s79, %s80
      %p94 = scmp.eq.s32.totalorder %s23, 7
      %p95 = por %p93, %p94
      %p97 = scmp.ne.s32.totalorder %s80, %s96
      %p98 = scmp.eq.s32.totalorder %s23, 0
      %p99 = por %p97, %p98
      %s100 = ssub.s32 %s24, %s43
      %s101 = ssub.s32 %s25, %s39
      %s102 = sor.u32 %s100, %s101
      %s103 = ssub.s32 %s26, %s35
      %s104 = sor.u32 %s102, %s103
      %p105 = scmp.eq.s32.totalorder %s104, 0
      %s107 = sadd.s32 %s106, 1
      %s108 = scalar_select %p105, %s106, %s107
      %p111 = pneg %p105
      %p112 = scmp.eq.s32.totalorder %s17, 7
      %p113 = por %p111, %p112
      %p114 = scmp.ne.s32.totalorder %s106, %s109
      %p115 = scmp.eq.s32.totalorder %s17, 0
      %p116 = por %p114, %p115
      %p117 = scmp.ne.s32.totalorder %s106, %s109
      %p118 = scmp.eq.s32.totalorder %s22, 7
      %p119 = por %p117, %p118
      %p120 = scmp.ne.s32.totalorder %s109, %s110
      %p121 = scmp.eq.s32.totalorder %s22, 0
      %p122 = por %p120, %p121
      %p123 = scmp.ne.s32.totalorder %s109, %s110
      %p124 = scmp.eq.s32.totalorder %s23, 7
      %p125 = por %p123, %p124
      %p127 = scmp.ne.s32.totalorder %s110, %s126
      %p128 = scmp.eq.s32.totalorder %s23, 0
      %p129 = por %p127, %p128
      %p130 = scmp.le.s32.totalorder 1, %s17
      %p131 = scmp.lt.s32.totalorder %s17, 9
      %p132 = pnand %p130, %p131
      %p133 = pneg %p132
      // Predicated region
      $region9: #{tpu_custom_call.1} parent=5 // pred_check
        _
      $region10: #{tpu_custom_call.1} parent=5 // pred_check_branch
        %135 = sbr.rel (%p132) target = $region12
      $region11: #{tpu_custom_call.1} parent=5 // pred_region
        %s136 = ssub.s32 %s17, 1
      $region12: #{tpu_custom_call.1} parent=5 // pred_fallthru
        _
      %p137 = scmp.lt.s32.totalorder %s17, 8
      // Predicated region
      $region13: #{tpu_custom_call.1} parent=5 // pred_check
        %p138 = pneg %p137
      $region14: #{tpu_custom_call.1} parent=5 // pred_check_branch
        %140 = sbr.rel (%p138) target = $region16
      $region15: #{tpu_custom_call.1} parent=5 // pred_region
        // Predicated region
        $region17: #{tpu_custom_call.1} parent=15 // pred_check
          %p141 = pneg %p58
        $region18: #{tpu_custom_call.1} parent=15 // pred_check_branch
          %143 = sbr.rel (%p141) target = $region20
        $region19: #{tpu_custom_call.1} parent=15 // pred_region
          %s144 = sand.u32 %s48, 1
          %s145 = scalar_lea.sflag [#allocation3], %s144
          %s146 = sand.u32 %s48, 1
          %s147 = smul.addr %s146, 128
          %s148 = scalar_lea.vmem [#allocation2], %s147
          %s149 = smul.u32 16, %s25
          %s150 = ssub.s32 1, %s149
          %s151 = smul.u32 8, %s150
          %s152 = ssub.s32 128, %s151
          %s153 = sshll.u32 %s152, 4
          %154 = vsyncadd %s145, %s153
          %p155 = scmp.ne.s32.totalorder 0, %s151
          %s156 = sadd.s32 %s149, %s24
          %s157 = smul.addr %s156, 8
          %s158 = scalar_lea.hbm %s0, %s157
          %s159 = smul.u32 8, %s150
          %s160 = sshll.u32 %s158, 4
          %s161 = int_to_ptr.hbm [resolvable:$true] %s160
          %s162 = sshll.u32 %s148, 4
          %s163 = int_to_ptr.vmem [resolvable:$true] %s162
          %s164 = sshll.u32 %s159, 4
          %168 = dma.hbm_to_vmem [thread:$0]  (%p155), %s161, %s164, %s163, %s145, 128, 128, 8
        $region20: #{tpu_custom_call.1} parent=15 // pred_fallthru
          _
        // Predicated region
        $region21: #{tpu_custom_call.1} parent=15 // pred_check
          %p169 = pneg %p86
        $region22: #{tpu_custom_call.1} parent=15 // pred_check_branch
          %171 = sbr.rel (%p169) target = $region24
        $region23: #{tpu_custom_call.1} parent=15 // pred_region
          %s172 = sand.u32 %s76, 1
          %s173 = scalar_lea.sflag [#allocation6], %s172
          %s174 = sand.u32 %s76, 1
          %s175 = smul.addr %s174, 128
          %s176 = scalar_lea.vmem [#allocation5], %s175
          %s177 = smul.u32 16, %s26
          %s178 = ssub.s32 1, %s177
          %s179 = smul.u32 8, %s178
          %s180 = ssub.s32 128, %s179
          %s181 = sshll.u32 %s180, 4
          %182 = vsyncadd %s173, %s181
          %p183 = scmp.ne.s32.totalorder 0, %s179
          %s184 = sadd.s32 %s177, %s24
          %s185 = smul.addr %s184, 8
          %s186 = scalar_lea.hbm %s1, %s185
          %s187 = smul.u32 8, %s178
          %s188 = sshll.u32 %s186, 4
          %s189 = int_to_ptr.hbm [resolvable:$true] %s188
          %s190 = sshll.u32 %s176, 4
          %s191 = int_to_ptr.vmem [resolvable:$true] %s190
          %s192 = sshll.u32 %s187, 4
          %196 = dma.hbm_to_vmem [thread:$0]  (%p183), %s189, %s192, %s191, %s173, 128, 128, 8
        $region24: #{tpu_custom_call.1} parent=15 // pred_fallthru
          _
      $region16: #{tpu_custom_call.1} parent=5 // pred_fallthru
        _
      %p197 = scmp.le.s32.totalorder 1, %s17
      %p198 = scmp.lt.s32.totalorder %s17, 9
      %p199 = pnand %p197, %p198
      %p200 = pneg %p199
      // Predicated region
      $region25: #{tpu_custom_call.1} parent=5 // pred_check
        _
      $region26: #{tpu_custom_call.1} parent=5 // pred_check_branch
        %202 = sbr.rel (%p199) target = $region28
      $region27: #{tpu_custom_call.1} parent=5 // pred_region
        %s203 = ssub.s32 %s17, 1
        %s204 = sand.u32 %s51, 1
        %s205 = scalar_lea.sflag [#allocation3], %s204
        %s206 = sand.u32 %s51, 1
        %s207 = smul.addr %s206, 128
        %s208 = scalar_lea.vmem [#allocation2], %s207
        // Predicated region
        $region29: #{tpu_custom_call.1} parent=27 // pred_check
          %p209 = pneg %p64
        $region30: #{tpu_custom_call.1} parent=27 // pred_check_branch
          %211 = sbr.rel (%p209) target = $region32
        $region31: #{tpu_custom_call.1} parent=27 // pred_region
          %213 = dma.done %s205, 2048
        $region32: #{tpu_custom_call.1} parent=27 // pred_fallthru
          _
        %s214 = sand.u32 %s79, 1
        %s215 = scalar_lea.sflag [#allocation6], %s214
        %s216 = sand.u32 %s79, 1
        %s217 = smul.addr %s216, 128
        %s218 = scalar_lea.vmem [#allocation5], %s217
        // Predicated region
        $region33: #{tpu_custom_call.1} parent=27 // pred_check
          %p219 = pneg %p92
        $region34: #{tpu_custom_call.1} parent=27 // pred_check_branch
          %221 = sbr.rel (%p219) target = $region36
        $region35: #{tpu_custom_call.1} parent=27 // pred_region
          %223 = dma.done %s215, 2048
        $region36: #{tpu_custom_call.1} parent=27 // pred_fallthru
          _
        %s224 = sand.u32 %s51, 1
        %s225 = scalar_lea.sflag [#allocation3], %s224
        %s226 = sand.u32 %s51, 1
        %s227 = smul.addr %s226, 128
        %s228 = scalar_lea.vmem [#allocation2], %s227
        %p229 = pneg %p64
        %p230 = pneg %p61
        %s231 = sand.u32 %s79, 1
        %s232 = scalar_lea.sflag [#allocation6], %s231
        %s233 = sand.u32 %s79, 1
        %s234 = smul.addr %s233, 128
        %s235 = scalar_lea.vmem [#allocation5], %s234
        %p236 = pneg %p92
        %p237 = pneg %p89
        %p238 = pneg %p122
        %p239 = pneg %p119
        %s240 = sand.u32 %s109, 1
        %s241 = scalar_lea.sflag [#allocation4], %s240
        %s242 = sand.u32 %s109, 1
        %s243 = smul.addr %s242, 128
        %s244 = scalar_lea.vmem [#allocation7], %s243
        %s245 = smul.u32 16, %s28
        %s246 = ssub.s32 1, %s245
        %s247 = smul.u32 8, %s246
        %s248 = smul.u32 16, %s29
        %s249 = ssub.s32 1, %s248
        %s250 = smul.u32 8, %s249
        %s251 = smul.u32 16, %s28
        %s252 = ssub.s32 1, %s251
        %s253 = smul.u32 8, %s252
        %v254 = vld [vmem:[%s208] sm:$0xff]
        %v255 = vld [vmem:[%s208 + $0x8] sm:$0xff]
        %v256 = vld [vmem:[%s208 + $0x10] sm:$0xff]
        %v257 = vld [vmem:[%s208 + $0x18] sm:$0xff]
        %v258 = vld [vmem:[%s208 + $0x20] sm:$0xff]
        %v259 = vld [vmem:[%s208 + $0x28] sm:$0xff]
        %v260 = vld [vmem:[%s208 + $0x30] sm:$0xff]
        %v261 = vld [vmem:[%s208 + $0x38] sm:$0xff]
        %v262 = vld [vmem:[%s208 + $0x40] sm:$0xff]
        %v263 = vld [vmem:[%s208 + $0x48] sm:$0xff]
        %v264 = vld [vmem:[%s208 + $0x50] sm:$0xff]
        %v265 = vld [vmem:[%s208 + $0x58] sm:$0xff]
        %v266 = vld [vmem:[%s208 + $0x60] sm:$0xff]
        %v267 = vld [vmem:[%s208 + $0x68] sm:$0xff]
        %v268 = vld [vmem:[%s208 + $0x70] sm:$0xff]
        %v269 = vld [vmem:[%s208 + $0x78] sm:$0xff]
        %v270 = vld [vmem:[%s218] sm:$0xff]
        %v271 = vld [vmem:[%s218 + $0x8] sm:$0xff]
        %v272 = vld [vmem:[%s218 + $0x10] sm:$0xff]
        %v273 = vld [vmem:[%s218 + $0x18] sm:$0xff]
        %v274 = vld [vmem:[%s218 + $0x20] sm:$0xff]
        %v275 = vld [vmem:[%s218 + $0x28] sm:$0xff]
        %v276 = vld [vmem:[%s218 + $0x30] sm:$0xff]
        %v277 = vld [vmem:[%s218 + $0x38] sm:$0xff]
        %v278 = vld [vmem:[%s218 + $0x40] sm:$0xff]
        %v279 = vld [vmem:[%s218 + $0x48] sm:$0xff]
        %v280 = vld [vmem:[%s218 + $0x50] sm:$0xff]
        %v281 = vld [vmem:[%s218 + $0x58] sm:$0xff]
        %v282 = vld [vmem:[%s218 + $0x60] sm:$0xff]
        %v283 = vld [vmem:[%s218 + $0x68] sm:$0xff]
        %v284 = vld [vmem:[%s218 + $0x70] sm:$0xff]
        %v285 = vld [vmem:[%s218 + $0x78] sm:$0xff]
        %vm286 = vcmask 261120
        %v288 = vsel %vm286, %v254, 0
        %v291 = vsel %vm286, %v255, 0
        %v294 = vsel %vm286, %v256, 0
        %v297 = vsel %vm286, %v257, 0
        %v300 = vsel %vm286, %v258, 0
        %v303 = vsel %vm286, %v259, 0
        %v306 = vsel %vm286, %v260, 0
        %v309 = vsel %vm286, %v261, 0
        %v312 = vsel %vm286, %v262, 0
        %v315 = vsel %vm286, %v263, 0
        %v318 = vsel %vm286, %v264, 0
        %v321 = vsel %vm286, %v265, 0
        %v324 = vsel %vm286, %v266, 0
        %v327 = vsel %vm286, %v267, 0
        %v330 = vsel %vm286, %v268, 0
        %v333 = vsel %vm286, %v269, 0
        %v336 = vsel %vm286, %v270, 0
        %v339 = vsel %vm286, %v271, 0
        %v342 = vsel %vm286, %v272, 0
        %v345 = vsel %vm286, %v273, 0
        %v348 = vsel %vm286, %v274, 0
        %v351 = vsel %vm286, %v275, 0
        %v354 = vsel %vm286, %v276, 0
        %v357 = vsel %vm286, %v277, 0
        %v360 = vsel %vm286, %v278, 0
        %v363 = vsel %vm286, %v279, 0
        %v366 = vsel %vm286, %v280, 0
        %v369 = vsel %vm286, %v281, 0
        %v372 = vsel %vm286, %v282, 0
        %v375 = vsel %vm286, %v283, 0
        %v378 = vsel %vm286, %v284, 0
        %v381 = vsel %vm286, %v285, 0
        %383 = vmatpush.xpose.msra.mxu0 %v381
        %384 = vmatpush.xpose.msra.mxu0 %v378
        %385 = vmatpush.xpose.msra.mxu0 %v375
        %386 = vmatpush.xpose.msra.mxu0 %v372
        %387 = vmatpush.xpose.msra.mxu0 %v369
        %388 = vmatpush.xpose.msra.mxu0 %v366
        %389 = vmatpush.xpose.msra.mxu0 %v363
        %390 = vmatpush.xpose.msra.mxu0 %v360
        %391 = vmatpush.xpose.msra.mxu0 %v357
        %392 = vmatpush.xpose.msra.mxu0 %v354
        %393 = vmatpush.xpose.msra.mxu0 %v351
        %394 = vmatpush.xpose.msra.mxu0 %v348
        %395 = vmatpush.xpose.msra.mxu0 %v345
        %396 = vmatpush.xpose.msra.mxu0 %v342
        %397 = vmatpush.xpose.msra.mxu0 %v339
        %398 = vmatpush.xpose.msra.mxu0 %v336
        %399 = vmatmul.f32.gmra.mxu0 %v288
        %v400 = vpop.f32.mrf.mxu0
        %v401 = vadd.f32 0.0, %v400
        %402 = vmatmul.f32.gmra.mxu0 %v291
        %v403 = vpop.f32.mrf.mxu0
        %v404 = vadd.f32 0.0, %v403
        %405 = vmatmul.f32.gmra.mxu0 %v294
        %v406 = vpop.f32.mrf.mxu0
        %v407 = vadd.f32 0.0, %v406
        %408 = vmatmul.f32.gmra.mxu0 %v297
        %v409 = vpop.f32.mrf.mxu0
        %v410 = vadd.f32 0.0, %v409
        %411 = vmatmul.f32.gmra.mxu0 %v300
        %v412 = vpop.f32.mrf.mxu0
        %v413 = vadd.f32 0.0, %v412
        %414 = vmatmul.f32.gmra.mxu0 %v303
        %v415 = vpop.f32.mrf.mxu0
        %v416 = vadd.f32 0.0, %v415
        %417 = vmatmul.f32.gmra.mxu0 %v306
        %v418 = vpop.f32.mrf.mxu0
        %v419 = vadd.f32 0.0, %v418
        %420 = vmatmul.f32.gmra.mxu0 %v309
        %v421 = vpop.f32.mrf.mxu0
        %v422 = vadd.f32 0.0, %v421
        %423 = vmatmul.f32.gmra.mxu0 %v312
        %v424 = vpop.f32.mrf.mxu0
        %v425 = vadd.f32 0.0, %v424
        %426 = vmatmul.f32.gmra.mxu0 %v315
        %v427 = vpop.f32.mrf.mxu0
        %v428 = vadd.f32 0.0, %v427
        %429 = vmatmul.f32.gmra.mxu0 %v318
        %v430 = vpop.f32.mrf.mxu0
        %v431 = vadd.f32 0.0, %v430
        %432 = vmatmul.f32.gmra.mxu0 %v321
        %v433 = vpop.f32.mrf.mxu0
        %v434 = vadd.f32 0.0, %v433
        %435 = vmatmul.f32.gmra.mxu0 %v324
        %v436 = vpop.f32.mrf.mxu0
        %v437 = vadd.f32 0.0, %v436
        %438 = vmatmul.f32.gmra.mxu0 %v327
        %v439 = vpop.f32.mrf.mxu0
        %v440 = vadd.f32 0.0, %v439
        %441 = vmatmul.f32.gmra.mxu0 %v330
        %v442 = vpop.f32.mrf.mxu0
        %v443 = vadd.f32 0.0, %v442
        %444 = vmatmul.f32.gmra.mxu0 %v333
        %v445 = vpop.f32.mrf.mxu0
        %v446 = vadd.f32 0.0, %v445
        %447 = vdwg.mxu0
        %448 = vst [vmem:[%s244] sm:$0xff] %v401
        %449 = vst [vmem:[%s244 + $0x8] sm:$0xff] %v404
        %450 = vst [vmem:[%s244 + $0x10] sm:$0xff] %v407
        %451 = vst [vmem:[%s244 + $0x18] sm:$0xff] %v410
        %452 = vst [vmem:[%s244 + $0x20] sm:$0xff] %v413
        %453 = vst [vmem:[%s244 + $0x28] sm:$0xff] %v416
        %454 = vst [vmem:[%s244 + $0x30] sm:$0xff] %v419
        %455 = vst [vmem:[%s244 + $0x38] sm:$0xff] %v422
        %456 = vst [vmem:[%s244 + $0x40] sm:$0xff] %v425
        %457 = vst [vmem:[%s244 + $0x48] sm:$0xff] %v428
        %458 = vst [vmem:[%s244 + $0x50] sm:$0xff] %v431
        %459 = vst [vmem:[%s244 + $0x58] sm:$0xff] %v434
        %460 = vst [vmem:[%s244 + $0x60] sm:$0xff] %v437
        %461 = vst [vmem:[%s244 + $0x68] sm:$0xff] %v440
        %462 = vst [vmem:[%s244 + $0x70] sm:$0xff] %v443
        %463 = vst [vmem:[%s244 + $0x78] sm:$0xff] %v446
        %s464 = sand.u32 %s109, 1
        %s465 = scalar_lea.sflag [#allocation4], %s464
        %s466 = sand.u32 %s109, 1
        %s467 = smul.addr %s466, 128
        %s468 = scalar_lea.vmem [#allocation7], %s467
        // Predicated region
        $region37: #{tpu_custom_call.1} parent=27 // pred_check
          %p469 = pneg %p119
        $region38: #{tpu_custom_call.1} parent=27 // pred_check_branch
          %471 = sbr.rel (%p469) target = $region40
        $region39: #{tpu_custom_call.1} parent=27 // pred_region
          %s472 = smul.u32 16, %s28
          %s473 = ssub.s32 1, %s472
          %s474 = smul.u32 8, %s473
          %s475 = ssub.s32 128, %s474
          %s476 = sshll.u32 %s475, 4
          %477 = vsyncadd %s465, %s476
          %p478 = scmp.ne.s32.totalorder 0, %s474
          %s479 = sadd.s32 %s29, %s472
          %s480 = sadd.s32 %s479, %s27
          %s481 = smul.addr %s480, 8
          %s482 = scalar_lea.hbm %s2, %s481
          %s483 = smul.u32 8, %s473
          %s484 = sshll.u32 %s468, 4
          %s485 = int_to_ptr.vmem [resolvable:$true] %s484
          %s486 = sshll.u32 %s482, 4
          %s487 = int_to_ptr.hbm [resolvable:$true] %s486
          %s488 = sshll.u32 %s483, 4
          %492 = dma.vmem_to_hbm [thread:$0]  (%p478), %s485, %s488, %s487, %s465, 128, 128, 8
        $region40: #{tpu_custom_call.1} parent=27 // pred_fallthru
          _
      $region28: #{tpu_custom_call.1} parent=5 // pred_fallthru
        _
      %p493 = scmp.le.s32.totalorder 2, %s17
      // Predicated region
      $region41: #{tpu_custom_call.1} parent=5 // pred_check
        %p494 = pneg %p493
      $region42: #{tpu_custom_call.1} parent=5 // pred_check_branch
        %496 = sbr.rel (%p494) target = $region44
      $region43: #{tpu_custom_call.1} parent=5 // pred_region
        %s497 = ssub.s32 %s17, 2
        // Predicated region
        $region45: #{tpu_custom_call.1} parent=43 // pred_check
          %p498 = pneg %p125
        $region46: #{tpu_custom_call.1} parent=43 // pred_check_branch
          %500 = sbr.rel (%p498) target = $region48
        $region47: #{tpu_custom_call.1} parent=43 // pred_region
          %s501 = sand.u32 %s110, 1
          %s502 = scalar_lea.sflag [#allocation4], %s501
          %s503 = sand.u32 %s110, 1
          %s504 = smul.addr %s503, 128
          %s505 = scalar_lea.vmem [#allocation7], %s504
          %507 = dma.done %s502, 2048
        $region48: #{tpu_custom_call.1} parent=43 // pred_fallthru
          _
      $region44: #{tpu_custom_call.1} parent=5 // pred_fallthru
        _
    $region6: #{tpu_custom_call.1} parent=1 // loop_footer
      %s21 = sadd.s32 1, %s17
    $region7: #{tpu_custom_call.1} parent=1 // loop_footer_branch
      %16 = sbr.rel target = $region3
    $region8: #{tpu_custom_call.1} parent=1 // loop_exit
      _
    %508 = vsyncpa [#allocation3], 1
    %s509 = scalar_lea.sflag [#allocation3], 1
    %510 = vsyncpa %s509, 1
    %511 = vsyncpa [#allocation6], 1
    %s512 = scalar_lea.sflag [#allocation6], 1
    %513 = vsyncpa %s512, 1
    %514 = vsyncpa [#allocation4], 1
    %s515 = scalar_lea.sflag [#allocation4], 1
    %516 = vsyncpa %s515, 1

</llo_original>
